<compile_context>
chip_gen: v7x
topology: tpu7x:2x2x1
jax: 0.10.0
libtpu: 0.0.40
codegen_flags: <defaults>
</compile_context>

<pallas_src>
import functools

import numpy as np
import jax
import jax.numpy as jnp
from jax.experimental import pallas as pl
from jax.experimental.pallas import tpu as pltpu


# ----------------------- in-kernel helpers (2-D, keepdims) -----------------------
def _sum_rows(x):            # [R, C] -> [R, 1]
    return jnp.sum(x, axis=1, keepdims=True)


def _sum_all(x):             # [R, C] -> [1, 1]
    return jnp.sum(_sum_rows(x), axis=0, keepdims=True)


def _mean_all(x):            # [R, C] -> [1, 1]
    return _sum_all(x) / x.size


def _softplus(x):            # stable  -log(1 - sigmoid(x)) == softplus(x)
    return jnp.maximum(x, 0.0) + jnp.log(1.0 + jnp.exp(-jnp.abs(x)))


# ====================== tiled rec_fw (the only heavy kernel) =====================
def _rec_fw_tiled_kernel(label_ref, logit_ref, nll_ref, acc_ref,
                         m_sc, se_sc, ll_sc, sl_sc, *, v_total, tv, ragged):
    """Online label-smoothed NLL over the vocab.  Grid = (B-blocks, V-blocks)."""
    vi = pl.program_id(1)

    @pl.when(vi == 0)
    def _():
        m_sc[...] = jnp.full_like(m_sc, -1e30)
        se_sc[...] = jnp.zeros_like(se_sc)
        ll_sc[...] = jnp.zeros_like(ll_sc)
        sl_sc[...] = jnp.zeros_like(sl_sc)

    logit = logit_ref[...].astype(jnp.float32)        # [tB, T, tV] upcast in-kernel
    label = label_ref[...]                            # [tB, T, 1] int32
    iota = jax.lax.broadcasted_iota(jnp.int32, logit.shape, 2) + vi * tv
    if ragged:                                        # mask the padded V columns
        valid = iota < v_total
        logit_m = jnp.where(valid, logit, -1e30)
        logit_z = jnp.where(valid, logit, 0.0)
    else:
        logit_m = logit
        logit_z = logit

    # label gather without an f32 one-hot (boolean compare folded into the select)
    ll_sc[...] += jnp.sum(jnp.where(iota == label, logit, 0.0), axis=-1, keepdims=True)
    sl_sc[...] += jnp.sum(logit_z, axis=-1, keepdims=True)

    tile_max = jnp.max(logit_m, axis=-1, keepdims=True)            # [tB, T, 1]
    m_new = jnp.maximum(m_sc[...], tile_max)
    se_sc[...] = (se_sc[...] * jnp.exp(m_sc[...] - m_new) +
                  jnp.sum(jnp.exp(logit_m - m_new), axis=-1, keepdims=True))
    m_sc[...] = m_new

    @pl.when(vi == pl.num_programs(1) - 1)
    def _():
        eps = 0.1
        lse = m_sc[...] + jnp.log(se_sc[...])
        nll = lse - ll_sc[...]
        smooth = v_total * lse - sl_sc[...]            # -sum_V log p, no [.,.,V] logp tensor
        nll_ref[...] = (1.0 - eps) * nll + (eps / v_total) * smooth
        # TODO(synk): ties count as correct (metric-only deviation from strict argmax).
        acc_ref[...] = (ll_sc[...] >= m_sc[...]).astype(jnp.float32)


def _rec_fw_tiled(logit, label):
    """Returns per-(b, t) unmasked nll and accuracy, each [B, T] f32."""
    B, T, V = logit.shape
    itemsize = jnp.dtype(logit.dtype).itemsize
    try:
        vmem_cap = int(pltpu.get_tpu_info().vmem_capacity_bytes)
    except Exception:                                  # interpret mode / older runtimes
        vmem_cap = 64 * 1024 * 1024                    # v7x per-TC physical VMEM (conservative)

    # leading "parallel" axis over B-blocks feeds v7x's second TensorCore
    nb = 2 if (B >= 16 and B % 2 == 0) else 1
    tb = B // nb
    budget = vmem_cap // 6                             # per-buffer logit tile budget
    col_bytes = tb * T * itemsize
    if col_bytes * V <= budget or V <= 128:
        tv, nv = V, 1
    else:
        tv = max(128, (budget // col_bytes) // 128 * 128)
        tv = min(tv, V)
        nv = -(-V // tv)
    ragged = (nv * tv != V)

    need = (2 * (tb * T * tv * itemsize)               # double-buffered logit tiles
            + 2 * (tb * T * 4)                         # double-buffered labels
            + 4 * (tb * T * 4)                         # scratch accumulators
            + 4 * (tb * T * 4)                         # two resident outputs
            + (1 << 20))                               # slack
    vmem_limit = int(min(int(vmem_cap * 0.9), max(2 * need, 16 * 1024 * 1024)))

    label3 = label.astype(jnp.int32)[:, :, None]       # [B, T, 1] (sublane-aligned w/ V-iota)
    kernel = functools.partial(_rec_fw_tiled_kernel, v_total=V, tv=tv, ragged=ragged)
    nll, acc = pl.pallas_call(
        kernel,
        out_shape=(jax.ShapeDtypeStruct((B, T, 1), jnp.float32),
                   jax.ShapeDtypeStruct((B, T, 1), jnp.float32)),
        grid_spec=pltpu.PrefetchScalarGridSpec(
            num_scalar_prefetch=0,
            grid=(nb, nv),
            in_specs=[pl.BlockSpec((tb, T, 1), lambda bi, vi: (bi, 0, 0)),
                      pl.BlockSpec((tb, T, tv), lambda bi, vi: (bi, 0, vi))],
            out_specs=[pl.BlockSpec((tb, T, 1), lambda bi, vi: (bi, 0, 0)),
                       pl.BlockSpec((tb, T, 1), lambda bi, vi: (bi, 0, 0))],
            scratch_shapes=[pltpu.VMEM((tb, T, 1), jnp.float32)] * 4),
        compiler_params=pltpu.CompilerParams(
            dimension_semantics=("parallel", "arbitrary"),
            vmem_limit_bytes=vmem_limit),
    )(label3, logit)
    return nll.reshape(B, T), acc.reshape(B, T)


# ------------------------------ per-loss kernel bodies ---------------------------
def _span_label_losses(n_layers, eos_coef, do_span, do_label, *refs):
    """Matched-span L1 + GIoU and weighted 2-class CE + class_error for every
    decoder layer (main + aux); matched-query gather is an in-kernel one-hot."""
    refs = list(refs)
    idx_ref = refs.pop(0)                              # [NL, B, 1] int32
    spans_ref = tgt_ref = logits_ref = None
    if do_span:
        spans_ref = refs.pop(0)                        # [2, NL, B, Q] (0 = cx, 1 = w)
        tgt_ref = refs.pop(0)                          # [B, 4] (cx, w, start, end)
    if do_label:
        logits_ref = refs.pop(0)                       # [2, NL, B, Q] (0 = fg, 1 = bg)

    b = idx_ref.shape[1]
    q = (spans_ref if do_span else logits_ref).shape[3]
    q_iota = jax.lax.broadcasted_iota(jnp.int32, (b, q), 1)
    if do_span:
        tgt = tgt_ref[...]
        t_cx, t_w = tgt[:, 0:1], tgt[:, 1:2]
        t_s, t_e = tgt[:, 2:3], tgt[:, 3:4]

    outs = []
    for l in range(n_layers):                          # small static unroll (cheap vs grid step)
        idx = idx_ref[l]                               # [B, 1] matched query per batch
        is_fg = q_iota == idx                          # [B, Q]
        onehot = is_fg.astype(jnp.float32)
        if do_span:
            cx = _sum_rows(spans_ref[0, l] * onehot)   # matched center
            w = _sum_rows(spans_ref[1, l] * onehot)    # matched width
            loss_span = (_sum_all(jnp.abs(cx - t_cx)) +
                         _sum_all(jnp.abs(w - t_w))) / (b * 2)        # L1 mean
            s_s = cx - 0.5 * w
            s_e = cx + 0.5 * w
            inter = jnp.maximum(jnp.minimum(s_e, t_e) - jnp.maximum(s_s, t_s), 0.0)
            union = (s_e - s_s) + (t_e - t_s) - inter
            iou = inter * pl.reciprocal(jnp.maximum(union, 1e-6), approx=True)
            enclose = jnp.maximum(jnp.maximum(s_e, t_e) - jnp.minimum(s_s, t_s), 1e-6)
            giou = iou - (enclose - union) * pl.reciprocal(enclose, approx=True)
            outs += [loss_span, _mean_all(1.0 - giou)]
        if do_label:
            l0 = logits_ref[0, l]                      # [B, Q] foreground logit
            l1 = logits_ref[1, l]                      # [B, Q] background logit
            m = jnp.maximum(l0, l1)
            lse = m + jnp.log(jnp.exp(l0 - m) + jnp.exp(l1 - m))
            sel = jnp.where(is_fg, l0, l1)
            wgt = jnp.where(is_fg, 1.0, eos_coef)
            loss_ce = _mean_all(wgt * (lse - sel))
            ml0 = _sum_rows(l0 * onehot)               # matched logits
            ml1 = _sum_rows(l1 * onehot)
            acc = _mean_all((ml0 >= ml1).astype(jnp.float32)) * 100.0
            outs += [loss_ce, 100.0 - acc]
    return outs


def _saliency_loss(rank_coef, sal_ref, neg_ref, label_ref, vmask_ref):
    """Rank-contrastive saliency loss; pos/neg halves handled in-kernel (no host
    concat), the 11 thresholds are an unrolled loop (no [11,B,L] temporaries)."""
    tau = 0.5
    sal = sal_ref[...]                                 # [B, L]
    neg = neg_ref[...]                                 # [B, L]
    label = label_ref[...]                             # [B, L]
    vmask = vmask_ref[...]                             # [B, L]
    b = sal.shape[0]

    # stable replacement for -log(1 - sigmoid(neg))
    loss_neg_pair = _sum_all(_softplus(neg) * vmask) / b

    masked_pos = vmask * sal + (1.0 - vmask) * (-1000.0)
    masked_neg = vmask * neg + (1.0 - vmask) * (-1000.0)
    drop = (label <= 100.0).astype(jnp.float32)
    cur_pos = masked_pos * drop / tau + (1.0 - drop) * (-1000.0)
    cur_neg = masked_neg / tau                         # neg-half labels are all zero
    row_max = jnp.maximum(jnp.max(cur_pos, axis=1, keepdims=True),
                          jnp.max(cur_neg, axis=1, keepdims=True))
    denom = (_sum_rows(jnp.exp(cur_pos - row_max)) +
             _sum_rows(jnp.exp(cur_neg - row_max)))
    log_prob = (cur_pos - row_max) - jnp.log(denom + 1e-6)
    weighted = log_prob * vmask                        # only the pos half can be positive

    total = jnp.zeros((b, 1), jnp.float32)
    for th in range(1, 12):                            # 11 small [B, L] passes, reusing `weighted`
        pos = (label >= float(th)).astype(jnp.float32)
        num = _sum_rows(pos * weighted)
        cnt = _sum_rows(pos)
        total = total - (num * pl.reciprocal(cnt + 1e-6, approx=True)) * \
            (cnt > 0.0).astype(jnp.float32)
    loss_rank = _sum_all(total) / (b * rank_coef)
    # TODO(synk): use_triplet branch (pos_idx/neg_idx triplet loss) not implemented.
    return [loss_rank + loss_neg_pair]


def _rec_ss_loss(tau, vfeat_ref, cmask_ref, wfeat_ref, wmask_ref, pos_ref):
    """Clip/word contrastive loss.  Masks broadcast over the lane axis in-kernel;
    cosine similarity uses the MXU at real batch sizes (VPU path below B=8)."""
    vfeat = vfeat_ref[...].astype(jnp.float32)         # [B, L, D]
    wfeat = wfeat_ref[...].astype(jnp.float32)         # [B, T, D]
    cmask = cmask_ref[...]                             # [B, L, 1]
    wmask = wmask_ref[...]                             # [B, T, 1]
    pos = pos_ref[...]                                 # [B, B]

    clip_feat = jnp.sum(vfeat * cmask, axis=1) / jnp.maximum(jnp.sum(cmask, axis=1), 1e-6)
    words_feat = jnp.sum(wfeat * wmask, axis=1) / jnp.maximum(jnp.sum(wmask, axis=1), 1e-6)
    nc = clip_feat / jnp.maximum(jnp.sqrt(_sum_rows(clip_feat * clip_feat)), 1e-12)
    nw = words_feat / jnp.maximum(jnp.sqrt(_sum_rows(words_feat * words_feat)), 1e-12)
    b = nc.shape[0]
    if b >= 8:
        # one MXU pass for the BxB cosine matrix (contraction over D, no transpose copy)
        cos = jax.lax.dot_general(nc, nw, (((1,), (1,)), ((), ())),
                                  preferred_element_type=jnp.float32) / tau
    else:
        cols = [_sum_rows(nc * nw[c:c + 1, :]) for c in range(b)]
        cos = jnp.concatenate(cols, axis=1) / tau
    logits = cos - jnp.max(cos, axis=1, keepdims=True)
    log_prob = logits - jnp.log(_sum_rows(jnp.exp(logits)) + 1e-6)
    mlpp = _sum_rows(pos * log_prob) * pl.reciprocal(_sum_rows(pos) + 1e-6, approx=True)
    return [_sum_all(-mlpp) / b]


def _rec_fw_finalize(nll_ref, acc_ref, mask_ref):
    """Tiny masked reduction of the per-(b,t) nll / acc produced by the tiled kernel."""
    nll = nll_ref[...]                                 # [B, T]
    acc = acc_ref[...]                                 # [B, T]
    mask = mask_ref[...]                               # [B, T]
    b = nll.shape[0]
    row_msum = _sum_rows(mask)
    per_b = _sum_rows(nll * mask) * pl.reciprocal(jnp.maximum(row_msum, 1e-6), approx=True)
    loss = _sum_all(per_b) / b
    mean_acc = _sum_all(acc * mask) * pl.reciprocal(jnp.maximum(_sum_all(mask), 1e-6),
                                                    approx=True)
    return [loss, mean_acc]


# ------------------------------ fused pallas_call wrapper ------------------------
def _fused_losses_call(entries, n_pad=128):
    """entries: list of (compute_fn, [input arrays], [output names]).
    Runs every tiny loss in ONE pallas_call; the scalars are assembled into a
    single lane-dense (1, 128) row and stored once.  Returns {name: scalar}."""
    arrays, counts, names_flat = [], [], []
    for _, args, names in entries:
        arrays.extend(args)
        counts.append(len(args))
        names_flat.extend(names)
    n_out = len(names_flat)
    assert n_out <= n_pad

    def kernel(*refs):
        out_ref = refs[-1]
        in_refs = refs[:-1]
        pos = 0
        vals = []
        for (fn, _, _), na in zip(entries, counts):
            vals.extend(fn(*in_refs[pos:pos + na]))
            pos += na
        lane = jax.lax.broadcasted_iota(jnp.int32, (1, n_pad), 1)
        row = jnp.zeros((1, n_pad), jnp.float32)
        for i, val in enumerate(vals):                 # val is (1, 1); broadcast over lanes
            row = row + jnp.where(lane == i, val, 0.0)
        out_ref[...] = row                             # single unmasked full-lane store

    out = pl.pallas_call(
        kernel,
        out_shape=jax.ShapeDtypeStruct((1, n_pad), jnp.float32),
        in_specs=[pl.BlockSpec(memory_space=pltpu.MemorySpace.VMEM)] * len(arrays),
        out_specs=pl.BlockSpec(memory_space=pltpu.MemorySpace.VMEM),
    )(*arrays)
    return {nm: out[0, i] for i, nm in enumerate(names_flat)}


# -------------------------------- host-side glue ---------------------------------
def generalized_temporal_iou(spans1, spans2):
    """spans in (start, end); [N, M] GIoU.  Plain JAX glue (only used for pos_mask)."""
    areas1 = spans1[:, 1] - spans1[:, 0]
    areas2 = spans2[:, 1] - spans2[:, 0]
    l = jnp.maximum(spans1[:, None, 0], spans2[None, :, 0])
    r = jnp.minimum(spans1[:, None, 1], spans2[None, :, 1])
    inter = jnp.clip(r - l, 0.0, None)
    union = areas1[:, None] + areas2[None, :] - inter
    iou = inter / union
    left = jnp.minimum(spans1[:, None, 0], spans2[None, :, 0])
    right = jnp.maximum(spans1[:, None, 1], spans2[None, :, 1])
    enclose = jnp.clip(right - left, 0.0, None)
    return iou - (enclose - union) / enclose


def simple_matcher(outputs, targets):
    """Deterministic stand-in for the external Hungarian matcher (one target per batch):
    pick the query minimizing (L1 span cost - foreground prob).  Returns [B, 1] int32."""
    pred_spans = outputs['pred_spans']
    pred_logits = outputs['pred_logits']
    norm_span = targets['norm_span']
    prob_fg = jax.nn.softmax(pred_logits, axis=-1)[..., 0]
    cost_span = jnp.sum(jnp.abs(pred_spans - norm_span[:, None, :]), axis=-1)
    idx = jnp.argmin(cost_span - prob_fg, axis=1).astype(jnp.int32)
    return idx[:, None]


# ---------------------------------- Criterion -------------------------------------
class CriterionPallas:
    def __init__(self, matcher, weight_dict, losses, eos_coef, span_loss_type, max_video_l,
                 rank_coef, use_triplet, saliency_margin=1, multi_clip=False,
                 gamma=0.9, recss_tau=0.5, is_vy=False):
        self.matcher = matcher
        self.weight_dict = weight_dict
        self.losses = losses
        self.span_loss_type = span_loss_type
        self.max_video_l = max_video_l
        self.saliency_margin = saliency_margin
        self.foreground_label = 0
        self.background_label = 1
        self.eos_coef = float(eos_coef)
        # mirrors register_buffer('empty_weight', [1, eos_coef])
        self.empty_weight = jnp.array([1.0, float(eos_coef)], dtype=jnp.float32)
        self.rank_coef = float(rank_coef)
        self.use_triplet = use_triplet
        self.multi_clip = multi_clip
        self.gamma = float(gamma)
        self.recss_tau = float(recss_tau)
        self.is_vy = is_vy
        # TODO(synk): multi_clip / is_vy / use_triplet config branches are not implemented.

    # ---- host-side staging for span/label losses (layout plumbing, few packed operands) ----
    def _span_label_entries(self, layers, idx_layers, targets, active):
        do_span = 'span' in active
        do_label = 'label' in active
        if not (do_span or do_label):
            return []
        if do_span and self.span_loss_type != 'l1':
            raise NotImplementedError
        nl = len(layers)
        suffixes = [''] + [f'_{i}' for i in range(nl - 1)]
        # [NL, B, 1] int32: index on the lane axis lane-broadcasts against the in-kernel Q-iota.
        idx_all = jnp.stack([ix[:, 0].astype(jnp.int32) for ix in idx_layers])[:, :, None]
        args = [idx_all]
        if do_span:
            spans = jnp.stack([ly['pred_spans'].astype(jnp.float32) for ly in layers])
            args.append(jnp.moveaxis(spans, -1, 0))                       # [2, NL, B, Q] lane-dense
            args.append(jnp.concatenate([targets['norm_span'], targets['norm_moment']],
                                        axis=1).astype(jnp.float32))       # [B, 4]
        if do_label:
            logits = jnp.stack([ly['pred_logits'].astype(jnp.float32) for ly in layers])
            args.append(jnp.moveaxis(logits, -1, 0))                       # [2, NL, B, Q]
        names = []
        for s in suffixes:
            if do_span:
                names += [f'loss_span{s}', f'loss_giou{s}']
            if do_label:
                names += [f'loss_label{s}', f'class_error{s}']
        return [(functools.partial(_span_label_losses, nl, self.eos_coef, do_span, do_label),
                 args, names)]

    def forward(self, outputs, targets, is_training=True):
        outputs_without_aux = {k: v for k, v in outputs.items() if k != 'aux_outputs'}
        indices = self.matcher(outputs_without_aux, targets)
        aux_list = outputs.get('aux_outputs', [])
        active = [l for l in self.losses if not (l == 'rec_fw' and not is_training)]
        for l in active:
            assert l in ('span', 'label', 'saliency', 'rec_ss', 'rec_fw'), \
                f'do you really want to compute {l} loss?'

        layers = [outputs] + list(aux_list)
        idx_layers = [indices] + [self.matcher(a, targets) for a in aux_list]

        entries = []
        entries += self._span_label_entries(layers, idx_layers, targets, active)

        if 'saliency' in active:
            label = targets['saliency_label'] if 'saliency_label' in targets else targets['clip_mask']
            entries.append((functools.partial(_saliency_loss, self.rank_coef),
                            [outputs['saliency_scores'].astype(jnp.float32),
                             outputs['neg_saliency_scores'].astype(jnp.float32),
                             label.astype(jnp.float32),
                             targets['video_mask'].astype(jnp.float32)],
                            ['loss_saliency']))

        if 'rec_ss' in active:
            num_clips = np.asarray(targets['num_clips'])                  # static python glue
            moments = targets['norm_moment']
            group_ids = jnp.asarray(np.repeat(np.arange(len(num_clips)), num_clips))
            giou = generalized_temporal_iou(moments, moments)
            # equivalent to torch.block_diag(per-group giou) >= gamma
            pos_mask = ((group_ids[:, None] == group_ids[None, :]) &
                        (giou >= self.gamma)).astype(jnp.float32)
            cmask = targets['clip_mask'].astype(jnp.float32)[:, :, None]           # [B, L, 1]
            wmask = outputs['expanded_words_mask'].astype(jnp.float32)[:, :, None]  # [B, T, 1]
            # features keep their wire dtype; masking happens in-kernel (no extra HBM array)
            entries.append((functools.partial(_rec_ss_loss, self.recss_tau),
                            [outputs['projed_video_feat'], cmask,
                             outputs['expanded_words_feat'], wmask, pos_mask],
                            ['loss_rec_ss']))

        if 'rec_fw' in active:
            # heavy [B, T, V] part: tiled/pipelined pallas_call; logits stay in wire dtype
            nll_bt, acc_bt = _rec_fw_tiled(outputs['recfw_words_logit'],
                                           targets['words_label'])
            entries.append((_rec_fw_finalize,
                            [nll_bt, acc_bt,
                             outputs['words_mask'].astype(jnp.float32)],
                            ['loss_rec_fw', 'rec_fw_acc']))

        losses = _fused_losses_call(entries) if entries else {}
        total_loss = sum(losses[k] * self.weight_dict[k] for k in losses if k in self.weight_dict)
        return losses, total_loss


# -------------------------------------- main ---------------------------------------
if __name__ == "__main__":
    B, Q, L, T, D, V = 8, 8, 16, 8, 32, 32
    key = jax.random.PRNGKey(0)
    ks = jax.random.split(key, 16)

    def _len_mask(total, lens):
        return (jnp.arange(total)[None, :] < jnp.asarray(lens)[:, None]).astype(jnp.float32)

    words_lens = [T, T - 1, T, T - 2, T, T - 1, T - 2, T]
    video_lens = [L, L - 2, L - 1, L, L - 3, L, L - 2, L - 1]
    rec_lens = [T, T - 2, T - 1, T, T, T - 1, T, T - 2]

    outputs = {
        'pred_logits': jax.random.normal(ks[0], (B, Q, 2), jnp.float32),
        'pred_spans': jax.nn.sigmoid(jax.random.normal(ks[1], (B, Q, 2), jnp.float32)),
        'saliency_scores': jax.random.normal(ks[2], (B, L), jnp.float32),
        'neg_saliency_scores': jax.random.normal(ks[3], (B, L), jnp.float32),
        'projed_video_feat': jax.random.normal(ks[4], (B, L, D), jnp.float32),
        'expanded_words_feat': jax.random.normal(ks[5], (B, T, D), jnp.float32),
        'expanded_words_mask': _len_mask(T, words_lens),
        # bf16 on the wire: the tiled rec_fw kernel upcasts in-kernel before exp/log
        'recfw_words_logit': jax.random.normal(ks[6], (B, T, V), jnp.float32).astype(jnp.bfloat16),
        'words_mask': _len_mask(T, rec_lens),
        'aux_outputs': [{
            'pred_logits': jax.random.normal(ks[7], (B, Q, 2), jnp.float32),
            'pred_spans': jax.nn.sigmoid(jax.random.normal(ks[8], (B, Q, 2), jnp.float32)),
        }],
    }

    center = jax.random.uniform(ks[9], (B,), minval=0.3, maxval=0.7)
    width = jax.random.uniform(ks[10], (B,), minval=0.15, maxval=0.35)
    norm_span = jnp.stack([center, width], axis=1)                                 # (cx, w)
    norm_moment = jnp.stack([center - width / 2, center + width / 2], axis=1)      # (start, end)
    clip_centers = (jnp.arange(L) + 0.5) / L
    clip_mask = ((clip_centers[None, :] >= norm_moment[:, 0:1]) &
                 (clip_centers[None, :] <= norm_moment[:, 1:2])).astype(jnp.float32)
    video_mask = _len_mask(L, video_lens)
    saliency_label = clip_mask * jax.random.randint(ks[11], (B, L), 1, 5).astype(jnp.float32)

    targets = {
        'norm_span': norm_span,
        'norm_moment': norm_moment,
        'video_mask': video_mask,
        'clip_mask': clip_mask,
        'saliency_label': saliency_label,
        'num_clips': [4, 4],
        'words_label': jax.random.randint(ks[12], (B, T), 0, V),
    }

    weight_dict = {'loss_span': 10.0, 'loss_giou': 1.0, 'loss_label': 4.0,
                   'loss_saliency': 1.0, 'loss_rec_ss': 1.0, 'loss_rec_fw': 1.0,
                   'loss_span_0': 10.0, 'loss_giou_0': 1.0, 'loss_label_0': 4.0}

    criterion = CriterionPallas(
        matcher=simple_matcher, weight_dict=weight_dict,
        losses=['span', 'label', 'saliency', 'rec_ss', 'rec_fw'],
        eos_coef=0.1, span_loss_type='l1', max_video_l=L,
        rank_coef=12.0, use_triplet=False, saliency_margin=1,
        multi_clip=False, gamma=0.9, recss_tau=0.5, is_vy=False)

    losses, total_loss = criterion.forward(outputs, targets, is_training=True)
    total_loss = jax.block_until_ready(total_loss)
    assert bool(jnp.isfinite(total_loss))
    print("KERNEL_OK")
</pallas_src>

<mosaic_0001>
module attributes {stable_mosaic.version = 11 : i64} {
  func.func @_rec_fw_tiled_kernel(%arg0: i32, %arg1: i32, %arg2: memref<8x8x1xi32, #tpu.memory_space<vmem>>, %arg3: memref<8x8x32xbf16, #tpu.memory_space<vmem>>, %arg4: memref<8x8x1xf32, #tpu.memory_space<vmem>>, %arg5: memref<8x8x1xf32, #tpu.memory_space<vmem>>, %arg6: memref<8x8x1xf32, #tpu.memory_space<vmem>>, %arg7: memref<8x8x1xf32, #tpu.memory_space<vmem>>, %arg8: memref<8x8x1xf32, #tpu.memory_space<vmem>>, %arg9: memref<8x8x1xf32, #tpu.memory_space<vmem>>) attributes {dimension_semantics = [#tpu.dimension_semantics<parallel>, #tpu.dimension_semantics<arbitrary>], iteration_bounds = array<i64: 1, 1>, scalar_prefetch = 0 : i64, scratch_operands = 4 : i64, tpu.core_type = #tpu.core_type<tc>, window_params = [{transform_indices = @transform_0, window_bounds = array<i64: 8, 8, 1>}, {transform_indices = @transform_1, window_bounds = array<i64: 8, 8, 32>}, {transform_indices = @transform_2, window_bounds = array<i64: 8, 8, 1>}, {transform_indices = @transform_3, window_bounds = array<i64: 8, 8, 1>}]} {
    %c0_i32 = arith.constant 0 : i32
    %0 = arith.cmpi eq, %arg1, %c0_i32 : i32
    %1 = arith.extui %0 : i1 to i32
    %c0_i32_0 = arith.constant 0 : i32
    %2 = arith.cmpi ne, %1, %c0_i32_0 : i32
    scf.if %2 {
      %cst_39 = arith.constant -1.000000e+30 : f32
      %44 = vector.broadcast %cst_39 : f32 to vector<8x8x1xf32>
      %c0_40 = arith.constant 0 : index
      %c0_41 = arith.constant 0 : index
      %c0_42 = arith.constant 0 : index
      %45 = vector.load %arg6[%c0_40, %c0_41, %c0_42] : memref<8x8x1xf32, #tpu.memory_space<vmem>>, vector<8x8x1xf32>
      tpu.vector_store %arg6[%c0_40, %c0_41, %c0_42], %44 {strides = array<i32>} : memref<8x8x1xf32, #tpu.memory_space<vmem>>, vector<8x8x1xf32>,
      %cst_43 = arith.constant 0.000000e+00 : f32
      %46 = vector.broadcast %cst_43 : f32 to vector<8x8x1xf32>
      %c0_44 = arith.constant 0 : index
      %c0_45 = arith.constant 0 : index
      %c0_46 = arith.constant 0 : index
      %47 = vector.load %arg7[%c0_44, %c0_45, %c0_46] : memref<8x8x1xf32, #tpu.memory_space<vmem>>, vector<8x8x1xf32>
      tpu.vector_store %arg7[%c0_44, %c0_45, %c0_46], %46 {strides = array<i32>} : memref<8x8x1xf32, #tpu.memory_space<vmem>>, vector<8x8x1xf32>,
      %cst_47 = arith.constant 0.000000e+00 : f32
      %48 = vector.broadcast %cst_47 : f32 to vector<8x8x1xf32>
      %c0_48 = arith.constant 0 : index
      %c0_49 = arith.constant 0 : index
      %c0_50 = arith.constant 0 : index
      %49 = vector.load %arg8[%c0_48, %c0_49, %c0_50] : memref<8x8x1xf32, #tpu.memory_space<vmem>>, vector<8x8x1xf32>
      tpu.vector_store %arg8[%c0_48, %c0_49, %c0_50], %48 {strides = array<i32>} : memref<8x8x1xf32, #tpu.memory_space<vmem>>, vector<8x8x1xf32>,
      %cst_51 = arith.constant 0.000000e+00 : f32
      %50 = vector.broadcast %cst_51 : f32 to vector<8x8x1xf32>
      %c0_52 = arith.constant 0 : index
      %c0_53 = arith.constant 0 : index
      %c0_54 = arith.constant 0 : index
      %51 = vector.load %arg9[%c0_52, %c0_53, %c0_54] : memref<8x8x1xf32, #tpu.memory_space<vmem>>, vector<8x8x1xf32>
      tpu.vector_store %arg9[%c0_52, %c0_53, %c0_54], %50 {strides = array<i32>} : memref<8x8x1xf32, #tpu.memory_space<vmem>>, vector<8x8x1xf32>,
    } else {
    }
    %c0 = arith.constant 0 : index
    %c0_1 = arith.constant 0 : index
    %c0_2 = arith.constant 0 : index
    %3 = vector.load %arg3[%c0, %c0_1, %c0_2] : memref<8x8x32xbf16, #tpu.memory_space<vmem>>, vector<8x8x32xbf16>
    %4 = arith.extf %3 : vector<8x8x32xbf16> to vector<8x8x32xf32>
    %c0_3 = arith.constant 0 : index
    %c0_4 = arith.constant 0 : index
    %c0_5 = arith.constant 0 : index
    %5 = vector.load %arg2[%c0_3, %c0_4, %c0_5] : memref<8x8x1xi32, #tpu.memory_space<vmem>>, vector<8x8x1xi32>
    %6 = tpu.iota {dimensions = array<i32: 2>} : vector<8x8x32xi32>
    %c32_i32 = arith.constant 32 : i32
    %7 = arith.muli %arg1, %c32_i32 : i32
    %8 = vector.broadcast %7 : i32 to vector<8x8x32xi32>
    %9 = arith.addi %6, %8 : vector<8x8x32xi32>
    %c0_6 = arith.constant 0 : index
    %c0_7 = arith.constant 0 : index
    %c0_8 = arith.constant 0 : index
    %10 = vector.load %arg8[%c0_6, %c0_7, %c0_8] : memref<8x8x1xf32, #tpu.memory_space<vmem>>, vector<8x8x1xf32>
    %11 = vector.broadcast %5 : vector<8x8x1xi32> to vector<8x8x32xi32>
    %12 = arith.cmpi eq, %9, %11 : vector<8x8x32xi32>
    %cst = arith.constant 0.000000e+00 : f32
    %13 = vector.broadcast %cst : f32 to vector<8x8x32xf32>
    %14 = arith.select %12, %4, %13 : vector<8x8x32xi1>, vector<8x8x32xf32>
    %cst_9 = arith.constant dense<0.000000e+00> : vector<8x8xf32>
    %15 = vector.multi_reduction <add>, %14, %cst_9 [2] : vector<8x8x32xf32> to vector<8x8xf32>
    %16 = vector.shape_cast %15 : vector<8x8xf32> to vector<8x8x1xf32>
    %17 = arith.addf %10, %16 : vector<8x8x1xf32>
    %c0_10 = arith.constant 0 : index
    %c0_11 = arith.constant 0 : index
    %c0_12 = arith.constant 0 : index
    %18 = vector.load %arg8[%c0_10, %c0_11, %c0_12] : memref<8x8x1xf32, #tpu.memory_space<vmem>>, vector<8x8x1xf32>
    tpu.vector_store %arg8[%c0_10, %c0_11, %c0_12], %17 {strides = array<i32>} : memref<8x8x1xf32, #tpu.memory_space<vmem>>, vector<8x8x1xf32>,
    %c0_13 = arith.constant 0 : index
    %c0_14 = arith.constant 0 : index
    %c0_15 = arith.constant 0 : index
    %19 = vector.load %arg9[%c0_13, %c0_14, %c0_15] : memref<8x8x1xf32, #tpu.memory_space<vmem>>, vector<8x8x1xf32>
    %cst_16 = arith.constant dense<0.000000e+00> : vector<8x8xf32>
    %20 = vector.multi_reduction <add>, %4, %cst_16 [2] : vector<8x8x32xf32> to vector<8x8xf32>
    %21 = vector.shape_cast %20 : vector<8x8xf32> to vector<8x8x1xf32>
    %22 = arith.addf %19, %21 : vector<8x8x1xf32>
    %c0_17 = arith.constant 0 : index
    %c0_18 = arith.constant 0 : index
    %c0_19 = arith.constant 0 : index
    %23 = vector.load %arg9[%c0_17, %c0_18, %c0_19] : memref<8x8x1xf32, #tpu.memory_space<vmem>>, vector<8x8x1xf32>
    tpu.vector_store %arg9[%c0_17, %c0_18, %c0_19], %22 {strides = array<i32>} : memref<8x8x1xf32, #tpu.memory_space<vmem>>, vector<8x8x1xf32>,
    %cst_20 = arith.constant dense<0xFF800000> : vector<8x8xf32>
    %24 = vector.multi_reduction <maximumf>, %4, %cst_20 [2] : vector<8x8x32xf32> to vector<8x8xf32>
    %25 = vector.shape_cast %24 : vector<8x8xf32> to vector<8x8x1xf32>
    %c0_21 = arith.constant 0 : index
    %c0_22 = arith.constant 0 : index
    %c0_23 = arith.constant 0 : index
    %26 = vector.load %arg6[%c0_21, %c0_22, %c0_23] : memref<8x8x1xf32, #tpu.memory_space<vmem>>, vector<8x8x1xf32>
    %27 = arith.maximumf %26, %25 : vector<8x8x1xf32>
    %c0_24 = arith.constant 0 : index
    %c0_25 = arith.constant 0 : index
    %c0_26 = arith.constant 0 : index
    %28 = vector.load %arg7[%c0_24, %c0_25, %c0_26] : memref<8x8x1xf32, #tpu.memory_space<vmem>>, vector<8x8x1xf32>
    %c0_27 = arith.constant 0 : index
    %c0_28 = arith.constant 0 : index
    %c0_29 = arith.constant 0 : index
    %29 = vector.load %arg6[%c0_27, %c0_28, %c0_29] : memref<8x8x1xf32, #tpu.memory_space<vmem>>, vector<8x8x1xf32>
    %30 = arith.subf %29, %27 : vector<8x8x1xf32>
    %31 = math.exp %30 : vector<8x8x1xf32>
    %32 = arith.mulf %28, %31 : vector<8x8x1xf32>
    %33 = vector.broadcast %27 : vector<8x8x1xf32> to vector<8x8x32xf32>
    %34 = arith.subf %4, %33 : vector<8x8x32xf32>
    %35 = math.exp %34 : vector<8x8x32xf32>
    %cst_30 = arith.constant dense<0.000000e+00> : vector<8x8xf32>
    %36 = vector.multi_reduction <add>, %35, %cst_30 [2] : vector<8x8x32xf32> to vector<8x8xf32>
    %37 = vector.shape_cast %36 : vector<8x8xf32> to vector<8x8x1xf32>
    %38 = arith.addf %32, %37 : vector<8x8x1xf32>
    %c0_31 = arith.constant 0 : index
    %c0_32 = arith.constant 0 : index
    %c0_33 = arith.constant 0 : index
    %39 = vector.load %arg7[%c0_31, %c0_32, %c0_33] : memref<8x8x1xf32, #tpu.memory_space<vmem>>, vector<8x8x1xf32>
    tpu.vector_store %arg7[%c0_31, %c0_32, %c0_33], %38 {strides = array<i32>} : memref<8x8x1xf32, #tpu.memory_space<vmem>>, vector<8x8x1xf32>,
    %c0_34 = arith.constant 0 : index
    %c0_35 = arith.constant 0 : index
    %c0_36 = arith.constant 0 : index
    %40 = vector.load %arg6[%c0_34, %c0_35, %c0_36] : memref<8x8x1xf32, #tpu.memory_space<vmem>>, vector<8x8x1xf32>
    tpu.vector_store %arg6[%c0_34, %c0_35, %c0_36], %27 {strides = array<i32>} : memref<8x8x1xf32, #tpu.memory_space<vmem>>, vector<8x8x1xf32>,
    %c0_i32_37 = arith.constant 0 : i32
    %41 = arith.cmpi eq, %arg1, %c0_i32_37 : i32
    %42 = arith.extui %41 : i1 to i32
    %c0_i32_38 = arith.constant 0 : i32
    %43 = arith.cmpi ne, %42, %c0_i32_38 : i32
    scf.if %43 {
      %c0_39 = arith.constant 0 : index
      %c0_40 = arith.constant 0 : index
      %c0_41 = arith.constant 0 : index
      %44 = vector.load %arg6[%c0_39, %c0_40, %c0_41] : memref<8x8x1xf32, #tpu.memory_space<vmem>>, vector<8x8x1xf32>
      %c0_42 = arith.constant 0 : index
      %c0_43 = arith.constant 0 : index
      %c0_44 = arith.constant 0 : index
      %45 = vector.load %arg7[%c0_42, %c0_43, %c0_44] : memref<8x8x1xf32, #tpu.memory_space<vmem>>, vector<8x8x1xf32>
      %46 = math.log %45 : vector<8x8x1xf32>
      %47 = arith.addf %44, %46 : vector<8x8x1xf32>
      %c0_45 = arith.constant 0 : index
      %c0_46 = arith.constant 0 : index
      %c0_47 = arith.constant 0 : index
      %48 = vector.load %arg8[%c0_45, %c0_46, %c0_47] : memref<8x8x1xf32, #tpu.memory_space<vmem>>, vector<8x8x1xf32>
      %49 = arith.subf %47, %48 : vector<8x8x1xf32>
      %cst_48 = arith.constant 3.200000e+01 : f32
      %50 = vector.broadcast %cst_48 : f32 to vector<8x8x1xf32>
      %51 = arith.mulf %50, %47 : vector<8x8x1xf32>
      %c0_49 = arith.constant 0 : index
      %c0_50 = arith.constant 0 : index
      %c0_51 = arith.constant 0 : index
      %52 = vector.load %arg9[%c0_49, %c0_50, %c0_51] : memref<8x8x1xf32, #tpu.memory_space<vmem>>, vector<8x8x1xf32>
      %53 = arith.subf %51, %52 : vector<8x8x1xf32>
      %cst_52 = arith.constant 0.899999976 : f32
      %54 = vector.broadcast %cst_52 : f32 to vector<8x8x1xf32>
      %55 = arith.mulf %54, %49 : vector<8x8x1xf32>
      %cst_53 = arith.constant 3.125000e-03 : f32
      %56 = vector.broadcast %cst_53 : f32 to vector<8x8x1xf32>
      %57 = arith.mulf %56, %53 : vector<8x8x1xf32>
      %58 = arith.addf %55, %57 : vector<8x8x1xf32>
      %c0_54 = arith.constant 0 : index
      %c0_55 = arith.constant 0 : index
      %c0_56 = arith.constant 0 : index
      %59 = vector.load %arg4[%c0_54, %c0_55, %c0_56] : memref<8x8x1xf32, #tpu.memory_space<vmem>>, vector<8x8x1xf32>
      tpu.vector_store %arg4[%c0_54, %c0_55, %c0_56], %58 {strides = array<i32>} : memref<8x8x1xf32, #tpu.memory_space<vmem>>, vector<8x8x1xf32>,
      %c0_57 = arith.constant 0 : index
      %c0_58 = arith.constant 0 : index
      %c0_59 = arith.constant 0 : index
      %60 = vector.load %arg8[%c0_57, %c0_58, %c0_59] : memref<8x8x1xf32, #tpu.memory_space<vmem>>, vector<8x8x1xf32>
      %c0_60 = arith.constant 0 : index
      %c0_61 = arith.constant 0 : index
      %c0_62 = arith.constant 0 : index
      %61 = vector.load %arg6[%c0_60, %c0_61, %c0_62] : memref<8x8x1xf32, #tpu.memory_space<vmem>>, vector<8x8x1xf32>
      %62 = arith.cmpf oge, %60, %61 : vector<8x8x1xf32>
      %63 = arith.extui %62 : vector<8x8x1xi1> to vector<8x8x1xi32>
      %64 = arith.sitofp %63 : vector<8x8x1xi32> to vector<8x8x1xf32>
      %c0_63 = arith.constant 0 : index
      %c0_64 = arith.constant 0 : index
      %c0_65 = arith.constant 0 : index
      %65 = vector.load %arg5[%c0_63, %c0_64, %c0_65] : memref<8x8x1xf32, #tpu.memory_space<vmem>>, vector<8x8x1xf32>
      tpu.vector_store %arg5[%c0_63, %c0_64, %c0_65], %64 {strides = array<i32>} : memref<8x8x1xf32, #tpu.memory_space<vmem>>, vector<8x8x1xf32>,
    } else {
    }
    return
  }
  func.func @transform_0(%arg0: i32, %arg1: i32) -> (i32, i32, i32) {
    %c0_i32 = arith.constant 0 : i32
    %c0_i32_0 = arith.constant 0 : i32
    %c0_i32_1 = arith.constant 0 : i32
    return %arg0, %c0_i32, %c0_i32_0 : i32, i32, i32
  }
  func.func @transform_1(%arg0: i32, %arg1: i32) -> (i32, i32, i32) {
    %c0_i32 = arith.constant 0 : i32
    %c0_i32_0 = arith.constant 0 : i32
    return %arg0, %c0_i32, %arg1 : i32, i32, i32
  }
  func.func @transform_2(%arg0: i32, %arg1: i32) -> (i32, i32, i32) {
    %c0_i32 = arith.constant 0 : i32
    %c0_i32_0 = arith.constant 0 : i32
    %c0_i32_1 = arith.constant 0 : i32
    return %arg0, %c0_i32, %c0_i32_0 : i32, i32, i32
  }
  func.func @transform_3(%arg0: i32, %arg1: i32) -> (i32, i32, i32) {
    %c0_i32 = arith.constant 0 : i32
    %c0_i32_0 = arith.constant 0 : i32
    %c0_i32_1 = arith.constant 0 : i32
    return %arg0, %c0_i32, %c0_i32_0 : i32, i32, i32
  }
}

</mosaic_0001>

<llo_original>
// kernel: tpu_custom_call.1
$region0: #{tpu_custom_call.1}
  #allocation0 [shape = 'u32[]', space=smem, size = 0x4, offset = 0x4, fixed_abs, tag = 'smem constant byte address 0x4 - core index']
  #allocation1 [shape = 'u32[144,128]{1,0:T(1,128)}', space=vmem, size = 0x12000, scoped, tag = 'internal scratch']
  #allocation2 [shape = 'f32[8,8,1]{2,1,0:T(8,128)}', space=vmem, size = 0x8000, scoped, tag = 'scratch operand']
  #allocation3 [shape = 'f32[8,8,1]{2,1,0:T(8,128)}', space=vmem, size = 0x8000, scoped, tag = 'scratch operand']
  #allocation4 [shape = 'f32[8,8,1]{2,1,0:T(8,128)}', space=vmem, size = 0x8000, scoped, tag = 'scratch operand']
  #allocation5 [shape = 'f32[8,8,1]{2,1,0:T(8,128)}', space=vmem, size = 0x8000, scoped, tag = 'scratch operand']
  %s0 = inlined_call_operand.vmem [shape: s32[8,8,1], index: 0, kind: input, shape index: {}]
  %s1 = inlined_call_operand.vmem [shape: bf16[8,8,32], index: 1, kind: input, shape index: {}]
  %s2 = inlined_call_operand.vmem [shape: f32[8,8,1], index: 2, kind: output, shape index: {0}]
  %s3 = inlined_call_operand.vmem [shape: f32[8,8,1], index: 3, kind: output, shape index: {1}]
  %4 = xla_tuple %s2, %s3
  %s5 = sld [smem:[#allocation0]]
  $region34: #{tpu_custom_call.1} parent=0
    _
  %s7 = ssub.s32 1, %s5
  %s8 = scalar_select 0, %s7, %s5
  // Predicated region
  $region2: #{tpu_custom_call.1} parent=0 // pred_check
    _
  $region3: #{tpu_custom_call.1} parent=0 // pred_check_branch
    %10 = sbr.rel (0) target = $region5
  $region4: #{tpu_custom_call.1} parent=0 // pred_region
    _
  $region5: #{tpu_custom_call.1} parent=0 // pred_fallthru
    _
  // Predicated region
  $region6: #{tpu_custom_call.1} parent=0 // pred_check
    _
  $region7: #{tpu_custom_call.1} parent=0 // pred_check_branch
    %12 = sbr.rel (0) target = $region9
  $region8: #{tpu_custom_call.1} parent=0 // pred_region
    _
  $region9: #{tpu_custom_call.1} parent=0 // pred_fallthru
    _
  %p13 = scmp.eq.s32.totalorder 0, 0
  // Predicated region
  $region10: #{tpu_custom_call.1} parent=0 // pred_check
    %p14 = pneg %p13
  $region11: #{tpu_custom_call.1} parent=0 // pred_check_branch
    %16 = sbr.rel (%p14) target = $region13
  $region12: #{tpu_custom_call.1} parent=0 // pred_region
    %vm17 = vcmask 7168
    %18 = vst.msk [vmem:[#allocation2] sm:$0xff] %vm17, -1e+30
    %19 = vst.msk [vmem:[#allocation2 + $0x8] sm:$0xff] %vm17, -1e+30
    %20 = vst.msk [vmem:[#allocation2 + $0x10] sm:$0xff] %vm17, -1e+30
    %21 = vst.msk [vmem:[#allocation2 + $0x18] sm:$0xff] %vm17, -1e+30
    %22 = vst.msk [vmem:[#allocation2 + $0x20] sm:$0xff] %vm17, -1e+30
    %23 = vst.msk [vmem:[#allocation2 + $0x28] sm:$0xff] %vm17, -1e+30
    %24 = vst.msk [vmem:[#allocation2 + $0x30] sm:$0xff] %vm17, -1e+30
    %25 = vst.msk [vmem:[#allocation2 + $0x38] sm:$0xff] %vm17, -1e+30
    %26 = vst.msk [vmem:[#allocation3] sm:$0xff] %vm17, 0.0
    %27 = vst.msk [vmem:[#allocation3 + $0x8] sm:$0xff] %vm17, 0.0
    %28 = vst.msk [vmem:[#allocation3 + $0x10] sm:$0xff] %vm17, 0.0
    %29 = vst.msk [vmem:[#allocation3 + $0x18] sm:$0xff] %vm17, 0.0
    %30 = vst.msk [vmem:[#allocation3 + $0x20] sm:$0xff] %vm17, 0.0
    %31 = vst.msk [vmem:[#allocation3 + $0x28] sm:$0xff] %vm17, 0.0
    %32 = vst.msk [vmem:[#allocation3 + $0x30] sm:$0xff] %vm17, 0.0
    %33 = vst.msk [vmem:[#allocation3 + $0x38] sm:$0xff] %vm17, 0.0
    %34 = vst.msk [vmem:[#allocation4] sm:$0xff] %vm17, 0.0
    %35 = vst.msk [vmem:[#allocation4 + $0x8] sm:$0xff] %vm17, 0.0
    %36 = vst.msk [vmem:[#allocation4 + $0x10] sm:$0xff] %vm17, 0.0
    %37 = vst.msk [vmem:[#allocation4 + $0x18] sm:$0xff] %vm17, 0.0
    %38 = vst.msk [vmem:[#allocation4 + $0x20] sm:$0xff] %vm17, 0.0
    %39 = vst.msk [vmem:[#allocation4 + $0x28] sm:$0xff] %vm17, 0.0
    %40 = vst.msk [vmem:[#allocation4 + $0x30] sm:$0xff] %vm17, 0.0
    %41 = vst.msk [vmem:[#allocation4 + $0x38] sm:$0xff] %vm17, 0.0
    %42 = vst.msk [vmem:[#allocation5] sm:$0xff] %vm17, 0.0
    %43 = vst.msk [vmem:[#allocation5 + $0x8] sm:$0xff] %vm17, 0.0
    %44 = vst.msk [vmem:[#allocation5 + $0x10] sm:$0xff] %vm17, 0.0
    %45 = vst.msk [vmem:[#allocation5 + $0x18] sm:$0xff] %vm17, 0.0
    %46 = vst.msk [vmem:[#allocation5 + $0x20] sm:$0xff] %vm17, 0.0
    %47 = vst.msk [vmem:[#allocation5 + $0x28] sm:$0xff] %vm17, 0.0
    %48 = vst.msk [vmem:[#allocation5 + $0x30] sm:$0xff] %vm17, 0.0
    %49 = vst.msk [vmem:[#allocation5 + $0x38] sm:$0xff] %vm17, 0.0
  $region13: #{tpu_custom_call.1} parent=0 // pred_fallthru
    _
  %v50 = vld [vmem:[%s1] sm:$0xf]
  %v51 = vld [vmem:[%s1 + $0x4] sm:$0xf]
  %v52 = vld [vmem:[%s1 + $0x8] sm:$0xf]
  %v53 = vld [vmem:[%s1 + $0xc] sm:$0xf]
  %v54 = vld [vmem:[%s1 + $0x10] sm:$0xf]
  %v55 = vld [vmem:[%s1 + $0x14] sm:$0xf]
  %v56 = vld [vmem:[%s1 + $0x18] sm:$0xf]
  %v57 = vld [vmem:[%s1 + $0x1c] sm:$0xf]
  %v58 = vunpack.c.l.bf16 %v50
  %v59 = vunpack.c.l.bf16 %v51
  %v60 = vunpack.c.l.bf16 %v52
  %v61 = vunpack.c.l.bf16 %v53
  %v62 = vunpack.c.l.bf16 %v54
  %v63 = vunpack.c.l.bf16 %v55
  %v64 = vunpack.c.l.bf16 %v56
  %v65 = vunpack.c.l.bf16 %v57
  %v66 = vld [vmem:[%s0] sm:$0xff]
  %v67 = vld [vmem:[%s0 + $0x8] sm:$0xff]
  %v68 = vld [vmem:[%s0 + $0x10] sm:$0xff]
  %v69 = vld [vmem:[%s0 + $0x18] sm:$0xff]
  %v70 = vld [vmem:[%s0 + $0x20] sm:$0xff]
  %v71 = vld [vmem:[%s0 + $0x28] sm:$0xff]
  %v72 = vld [vmem:[%s0 + $0x30] sm:$0xff]
  %v73 = vld [vmem:[%s0 + $0x38] sm:$0xff]
  %v74 = vlaneseq
  %v75 = vand.u32 %v74, 127
  %s76 = smul.u32 0, 32
  %v77 = vstv %s76
  %v78 = vadd.s32 %v75, %v77
  %v79 = vld [vmem:[#allocation4] sm:$0xff]
  %v80 = vld [vmem:[#allocation4 + $0x8] sm:$0xff]
  %v81 = vld [vmem:[#allocation4 + $0x10] sm:$0xff]
  %v82 = vld [vmem:[#allocation4 + $0x18] sm:$0xff]
  %v83 = vld [vmem:[#allocation4 + $0x20] sm:$0xff]
  %v84 = vld [vmem:[#allocation4 + $0x28] sm:$0xff]
  %v85 = vld [vmem:[#allocation4 + $0x30] sm:$0xff]
  %v86 = vld [vmem:[#allocation4 + $0x38] sm:$0xff]
  %87 = vset.pattern.permute.xlu0 0
  %88 = vperm.xlu0 %87, %v66
  %v89 = vpop.permute.xlu0 %88
  %90 = vset.pattern.permute.xlu0 0
  %91 = vperm.xlu0 %90, %v67
  %v92 = vpop.permute.xlu0 %91
  %93 = vset.pattern.permute.xlu0 0
  %94 = vperm.xlu0 %93, %v68
  %v95 = vpop.permute.xlu0 %94
  %96 = vset.pattern.permute.xlu0 0
  %97 = vperm.xlu0 %96, %v69
  %v98 = vpop.permute.xlu0 %97
  %99 = vset.pattern.permute.xlu0 0
  %100 = vperm.xlu0 %99, %v70
  %v101 = vpop.permute.xlu0 %100
  %102 = vset.pattern.permute.xlu0 0
  %103 = vperm.xlu0 %102, %v71
  %v104 = vpop.permute.xlu0 %103
  %105 = vset.pattern.permute.xlu0 0
  %106 = vperm.xlu0 %105, %v72
  %v107 = vpop.permute.xlu0 %106
  %108 = vset.pattern.permute.xlu0 0
  %109 = vperm.xlu0 %108, %v73
  %v110 = vpop.permute.xlu0 %109
  %vm111 = vcmp.eq.s32.totalorder %v78, %v89
  %vm112 = vcmp.eq.s32.totalorder %v78, %v92
  %vm113 = vcmp.eq.s32.totalorder %v78, %v95
  %vm114 = vcmp.eq.s32.totalorder %v78, %v98
  %vm115 = vcmp.eq.s32.totalorder %v78, %v101
  %vm116 = vcmp.eq.s32.totalorder %v78, %v104
  %vm117 = vcmp.eq.s32.totalorder %v78, %v107
  %vm118 = vcmp.eq.s32.totalorder %v78, %v110
  %v119 = vsel %vm111, %v58, 0.0
  %v120 = vsel %vm112, %v59, 0.0
  %v121 = vsel %vm113, %v60, 0.0
  %v122 = vsel %vm114, %v61, 0.0
  %v123 = vsel %vm115, %v62, 0.0
  %v124 = vsel %vm116, %v63, 0.0
  %v125 = vsel %vm117, %v64, 0.0
  %v126 = vsel %vm118, %v65, 0.0
  %vm127 = vcmask 261120
  %v128 = vsel %vm127, %v119, 0.0
  %129 = vadd.xlane.f32.xlu0 %v128
  %v130 = vpop.xlane.xlu0 %129
  %v131 = vsel %vm127, %v120, 0.0
  %132 = vadd.xlane.f32.xlu0 %v131
  %v133 = vpop.xlane.xlu0 %132
  %v134 = vsel %vm127, %v121, 0.0
  %135 = vadd.xlane.f32.xlu0 %v134
  %v136 = vpop.xlane.xlu0 %135
  %v137 = vsel %vm127, %v122, 0.0
  %138 = vadd.xlane.f32.xlu0 %v137
  %v139 = vpop.xlane.xlu0 %138
  %v140 = vsel %vm127, %v123, 0.0
  %141 = vadd.xlane.f32.xlu0 %v140
  %v142 = vpop.xlane.xlu0 %141
  %v143 = vsel %vm127, %v124, 0.0
  %144 = vadd.xlane.f32.xlu0 %v143
  %v145 = vpop.xlane.xlu0 %144
  %v146 = vsel %vm127, %v125, 0.0
  %147 = vadd.xlane.f32.xlu0 %v146
  %v148 = vpop.xlane.xlu0 %147
  %v149 = vsel %vm127, %v126, 0.0
  %150 = vadd.xlane.f32.xlu0 %v149
  %v151 = vpop.xlane.xlu0 %150
  %v152 = vadd.f32 %v79, %v130
  %v153 = vadd.f32 %v80, %v133
  %v154 = vadd.f32 %v81, %v136
  %v155 = vadd.f32 %v82, %v139
  %v156 = vadd.f32 %v83, %v142
  %v157 = vadd.f32 %v84, %v145
  %v158 = vadd.f32 %v85, %v148
  %v159 = vadd.f32 %v86, %v151
  %vm160 = vcmask 7168
  %161 = vst.msk [vmem:[#allocation4] sm:$0xff] %vm160, %v152
  %162 = vst.msk [vmem:[#allocation4 + $0x8] sm:$0xff] %vm160, %v153
  %163 = vst.msk [vmem:[#allocation4 + $0x10] sm:$0xff] %vm160, %v154
  %164 = vst.msk [vmem:[#allocation4 + $0x18] sm:$0xff] %vm160, %v155
  %165 = vst.msk [vmem:[#allocation4 + $0x20] sm:$0xff] %vm160, %v156
  %166 = vst.msk [vmem:[#allocation4 + $0x28] sm:$0xff] %vm160, %v157
  %167 = vst.msk [vmem:[#allocation4 + $0x30] sm:$0xff] %vm160, %v158
  %168 = vst.msk [vmem:[#allocation4 + $0x38] sm:$0xff] %vm160, %v159
  %v169 = vld [vmem:[#allocation5] sm:$0xff]
  %v170 = vld [vmem:[#allocation5 + $0x8] sm:$0xff]
  %v171 = vld [vmem:[#allocation5 + $0x10] sm:$0xff]
  %v172 = vld [vmem:[#allocation5 + $0x18] sm:$0xff]
  %v173 = vld [vmem:[#allocation5 + $0x20] sm:$0xff]
  %v174 = vld [vmem:[#allocation5 + $0x28] sm:$0xff]
  %v175 = vld [vmem:[#allocation5 + $0x30] sm:$0xff]
  %v176 = vld [vmem:[#allocation5 + $0x38] sm:$0xff]
  %v177 = vsel %vm127, %v58, 0.0
  %178 = vadd.xlane.f32.xlu0 %v177
  %v179 = vpop.xlane.xlu0 %178
  %v180 = vsel %vm127, %v59, 0.0
  %181 = vadd.xlane.f32.xlu0 %v180
  %v182 = vpop.xlane.xlu0 %181
  %v183 = vsel %vm127, %v60, 0.0
  %184 = vadd.xlane.f32.xlu0 %v183
  %v185 = vpop.xlane.xlu0 %184
  %v186 = vsel %vm127, %v61, 0.0
  %187 = vadd.xlane.f32.xlu0 %v186
  %v188 = vpop.xlane.xlu0 %187
  %v189 = vsel %vm127, %v62, 0.0
  %190 = vadd.xlane.f32.xlu0 %v189
  %v191 = vpop.xlane.xlu0 %190
  %v192 = vsel %vm127, %v63, 0.0
  %193 = vadd.xlane.f32.xlu0 %v192
  %v194 = vpop.xlane.xlu0 %193
  %v195 = vsel %vm127, %v64, 0.0
  %196 = vadd.xlane.f32.xlu0 %v195
  %v197 = vpop.xlane.xlu0 %196
  %v198 = vsel %vm127, %v65, 0.0
  %199 = vadd.xlane.f32.xlu0 %v198
  %v200 = vpop.xlane.xlu0 %199
  %v201 = vadd.f32 %v169, %v179
  %v202 = vadd.f32 %v170, %v182
  %v203 = vadd.f32 %v171, %v185
  %v204 = vadd.f32 %v172, %v188
  %v205 = vadd.f32 %v173, %v191
  %v206 = vadd.f32 %v174, %v194
  %v207 = vadd.f32 %v175, %v197
  %v208 = vadd.f32 %v176, %v200
  %209 = vst.msk [vmem:[#allocation5] sm:$0xff] %vm160, %v201
  %210 = vst.msk [vmem:[#allocation5 + $0x8] sm:$0xff] %vm160, %v202
  %211 = vst.msk [vmem:[#allocation5 + $0x10] sm:$0xff] %vm160, %v203
  %212 = vst.msk [vmem:[#allocation5 + $0x18] sm:$0xff] %vm160, %v204
  %213 = vst.msk [vmem:[#allocation5 + $0x20] sm:$0xff] %vm160, %v205
  %214 = vst.msk [vmem:[#allocation5 + $0x28] sm:$0xff] %vm160, %v206
  %215 = vst.msk [vmem:[#allocation5 + $0x30] sm:$0xff] %vm160, %v207
  %216 = vst.msk [vmem:[#allocation5 + $0x38] sm:$0xff] %vm160, %v208
  %v217 = vsel %vm127, %v58, -inf
  %218 = vmax.xlane.f32.xlu0 %v217
  %v219 = vpop.xlane.xlu0 %218
  %v220 = vsel %vm127, %v59, -inf
  %221 = vmax.xlane.f32.xlu0 %v220
  %v222 = vpop.xlane.xlu0 %221
  %v223 = vsel %vm127, %v60, -inf
  %224 = vmax.xlane.f32.xlu0 %v223
  %v225 = vpop.xlane.xlu0 %224
  %v226 = vsel %vm127, %v61, -inf
  %227 = vmax.xlane.f32.xlu0 %v226
  %v228 = vpop.xlane.xlu0 %227
  %v229 = vsel %vm127, %v62, -inf
  %230 = vmax.xlane.f32.xlu0 %v229
  %v231 = vpop.xlane.xlu0 %230
  %v232 = vsel %vm127, %v63, -inf
  %233 = vmax.xlane.f32.xlu0 %v232
  %v234 = vpop.xlane.xlu0 %233
  %v235 = vsel %vm127, %v64, -inf
  %236 = vmax.xlane.f32.xlu0 %v235
  %v237 = vpop.xlane.xlu0 %236
  %v238 = vsel %vm127, %v65, -inf
  %239 = vmax.xlane.f32.xlu0 %v238
  %v240 = vpop.xlane.xlu0 %239
  %v241 = vld [vmem:[#allocation2] sm:$0xff]
  %v242 = vld [vmem:[#allocation2 + $0x8] sm:$0xff]
  %v243 = vld [vmem:[#allocation2 + $0x10] sm:$0xff]
  %v244 = vld [vmem:[#allocation2 + $0x18] sm:$0xff]
  %v245 = vld [vmem:[#allocation2 + $0x20] sm:$0xff]
  %v246 = vld [vmem:[#allocation2 + $0x28] sm:$0xff]
  %v247 = vld [vmem:[#allocation2 + $0x30] sm:$0xff]
  %v248 = vld [vmem:[#allocation2 + $0x38] sm:$0xff]
  %v249 = vmax.f32 %v241, %v219
  %v250 = vmax.f32 %v242, %v222
  %v251 = vmax.f32 %v243, %v225
  %v252 = vmax.f32 %v244, %v228
  %v253 = vmax.f32 %v245, %v231
  %v254 = vmax.f32 %v246, %v234
  %v255 = vmax.f32 %v247, %v237
  %v256 = vmax.f32 %v248, %v240
  %v257 = vld [vmem:[#allocation3] sm:$0xff]
  %v258 = vld [vmem:[#allocation3 + $0x8] sm:$0xff]
  %v259 = vld [vmem:[#allocation3 + $0x10] sm:$0xff]
  %v260 = vld [vmem:[#allocation3 + $0x18] sm:$0xff]
  %v261 = vld [vmem:[#allocation3 + $0x20] sm:$0xff]
  %v262 = vld [vmem:[#allocation3 + $0x28] sm:$0xff]
  %v263 = vld [vmem:[#allocation3 + $0x30] sm:$0xff]
  %v264 = vld [vmem:[#allocation3 + $0x38] sm:$0xff]
  %v265 = vsub.f32 %v241, %v249
  %v266 = vsub.f32 %v242, %v250
  %v267 = vsub.f32 %v243, %v251
  %v268 = vsub.f32 %v244, %v252
  %v269 = vsub.f32 %v245, %v253
  %v270 = vsub.f32 %v246, %v254
  %v271 = vsub.f32 %v247, %v255
  %v272 = vsub.f32 %v248, %v256
  %v273 = vmul.f32 %v265, 1.442695
  %v274 = vpow.pop %v273
  %v275 = vmul.f32 %v266, 1.442695
  %v276 = vpow.pop %v275
  %v277 = vmul.f32 %v267, 1.442695
  %v278 = vpow.pop %v277
  %v279 = vmul.f32 %v268, 1.442695
  %v280 = vpow.pop %v279
  %v281 = vmul.f32 %v269, 1.442695
  %v282 = vpow.pop %v281
  %v283 = vmul.f32 %v270, 1.442695
  %v284 = vpow.pop %v283
  %v285 = vmul.f32 %v271, 1.442695
  %v286 = vpow.pop %v285
  %v287 = vmul.f32 %v272, 1.442695
  %v288 = vpow.pop %v287
  %v289 = vmul.f32 %v257, %v274
  %v290 = vmul.f32 %v258, %v276
  %v291 = vmul.f32 %v259, %v278
  %v292 = vmul.f32 %v260, %v280
  %v293 = vmul.f32 %v261, %v282
  %v294 = vmul.f32 %v262, %v284
  %v295 = vmul.f32 %v263, %v286
  %v296 = vmul.f32 %v264, %v288
  %298 = vset.pattern.permute.xlu0 0
  %299 = vperm.xlu0 %298, %v249
  %v300 = vpop.permute.xlu0 %299
  %303 = vset.pattern.permute.xlu0 0
  %304 = vperm.xlu0 %303, %v250
  %v305 = vpop.permute.xlu0 %304
  %308 = vset.pattern.permute.xlu0 0
  %309 = vperm.xlu0 %308, %v251
  %v310 = vpop.permute.xlu0 %309
  %313 = vset.pattern.permute.xlu0 0
  %314 = vperm.xlu0 %313, %v252
  %v315 = vpop.permute.xlu0 %314
  %318 = vset.pattern.permute.xlu0 0
  %319 = vperm.xlu0 %318, %v253
  %v320 = vpop.permute.xlu0 %319
  %323 = vset.pattern.permute.xlu0 0
  %324 = vperm.xlu0 %323, %v254
  %v325 = vpop.permute.xlu0 %324
  %328 = vset.pattern.permute.xlu0 0
  %329 = vperm.xlu0 %328, %v255
  %v330 = vpop.permute.xlu0 %329
  %333 = vset.pattern.permute.xlu0 0
  %334 = vperm.xlu0 %333, %v256
  %v335 = vpop.permute.xlu0 %334
  %v337 = vsub.f32 %v58, %v300
  %v338 = vsub.f32 %v59, %v305
  %v339 = vsub.f32 %v60, %v310
  %v340 = vsub.f32 %v61, %v315
  %v341 = vsub.f32 %v62, %v320
  %v342 = vsub.f32 %v63, %v325
  %v343 = vsub.f32 %v64, %v330
  %v344 = vsub.f32 %v65, %v335
  %v345 = vmul.f32 %v337, 1.442695
  %v346 = vpow.pop %v345
  %v347 = vmul.f32 %v338, 1.442695
  %v348 = vpow.pop %v347
  %v349 = vmul.f32 %v339, 1.442695
  %v350 = vpow.pop %v349
  %v351 = vmul.f32 %v340, 1.442695
  %v352 = vpow.pop %v351
  %v353 = vmul.f32 %v341, 1.442695
  %v354 = vpow.pop %v353
  %v355 = vmul.f32 %v342, 1.442695
  %v356 = vpow.pop %v355
  %v357 = vmul.f32 %v343, 1.442695
  %v358 = vpow.pop %v357
  %v359 = vmul.f32 %v344, 1.442695
  %v360 = vpow.pop %v359
  %v361 = vsel %vm127, %v346, 0.0
  %362 = vadd.xlane.f32.xlu0 %v361
  %v363 = vpop.xlane.xlu0 %362
  %v364 = vsel %vm127, %v348, 0.0
  %365 = vadd.xlane.f32.xlu0 %v364
  %v366 = vpop.xlane.xlu0 %365
  %v367 = vsel %vm127, %v350, 0.0
  %368 = vadd.xlane.f32.xlu0 %v367
  %v369 = vpop.xlane.xlu0 %368
  %v370 = vsel %vm127, %v352, 0.0
  %371 = vadd.xlane.f32.xlu0 %v370
  %v372 = vpop.xlane.xlu0 %371
  %v373 = vsel %vm127, %v354, 0.0
  %374 = vadd.xlane.f32.xlu0 %v373
  %v375 = vpop.xlane.xlu0 %374
  %v376 = vsel %vm127, %v356, 0.0
  %377 = vadd.xlane.f32.xlu0 %v376
  %v378 = vpop.xlane.xlu0 %377
  %v379 = vsel %vm127, %v358, 0.0
  %380 = vadd.xlane.f32.xlu0 %v379
  %v381 = vpop.xlane.xlu0 %380
  %v382 = vsel %vm127, %v360, 0.0
  %383 = vadd.xlane.f32.xlu0 %v382
  %v384 = vpop.xlane.xlu0 %383
  %v385 = vadd.f32 %v289, %v363
  %v386 = vadd.f32 %v290, %v366
  %v387 = vadd.f32 %v291, %v369
  %v388 = vadd.f32 %v292, %v372
  %v389 = vadd.f32 %v293, %v375
  %v390 = vadd.f32 %v294, %v378
  %v391 = vadd.f32 %v295, %v381
  %v392 = vadd.f32 %v296, %v384
  %393 = vst.msk [vmem:[#allocation3] sm:$0xff] %vm160, %v385
  %394 = vst.msk [vmem:[#allocation3 + $0x8] sm:$0xff] %vm160, %v386
  %395 = vst.msk [vmem:[#allocation3 + $0x10] sm:$0xff] %vm160, %v387
  %396 = vst.msk [vmem:[#allocation3 + $0x18] sm:$0xff] %vm160, %v388
  %397 = vst.msk [vmem:[#allocation3 + $0x20] sm:$0xff] %vm160, %v389
  %398 = vst.msk [vmem:[#allocation3 + $0x28] sm:$0xff] %vm160, %v390
  %399 = vst.msk [vmem:[#allocation3 + $0x30] sm:$0xff] %vm160, %v391
  %400 = vst.msk [vmem:[#allocation3 + $0x38] sm:$0xff] %vm160, %v392
  %401 = vst.msk [vmem:[#allocation2] sm:$0xff] %vm160, %v249
  %402 = vst.msk [vmem:[#allocation2 + $0x8] sm:$0xff] %vm160, %v250
  %403 = vst.msk [vmem:[#allocation2 + $0x10] sm:$0xff] %vm160, %v251
  %404 = vst.msk [vmem:[#allocation2 + $0x18] sm:$0xff] %vm160, %v252
  %405 = vst.msk [vmem:[#allocation2 + $0x20] sm:$0xff] %vm160, %v253
  %406 = vst.msk [vmem:[#allocation2 + $0x28] sm:$0xff] %vm160, %v254
  %407 = vst.msk [vmem:[#allocation2 + $0x30] sm:$0xff] %vm160, %v255
  %408 = vst.msk [vmem:[#allocation2 + $0x38] sm:$0xff] %vm160, %v256
  // Predicated region
  $region14: #{tpu_custom_call.1} parent=0 // pred_check
    %p409 = pneg %p13
  $region15: #{tpu_custom_call.1} parent=0 // pred_check_branch
    %411 = sbr.rel (%p409) target = $region17
  $region16: #{tpu_custom_call.1} parent=0 // pred_region
    %v412 = vld [vmem:[#allocation2] sm:$0xff]
    %v413 = vld [vmem:[#allocation2 + $0x8] sm:$0xff]
    %v414 = vld [vmem:[#allocation2 + $0x10] sm:$0xff]
    %v415 = vld [vmem:[#allocation2 + $0x18] sm:$0xff]
    %v416 = vld [vmem:[#allocation2 + $0x20] sm:$0xff]
    %v417 = vld [vmem:[#allocation2 + $0x28] sm:$0xff]
    %v418 = vld [vmem:[#allocation2 + $0x30] sm:$0xff]
    %v419 = vld [vmem:[#allocation2 + $0x38] sm:$0xff]
    %v420 = vld [vmem:[#allocation3] sm:$0xff]
    %v421 = vld [vmem:[#allocation3 + $0x8] sm:$0xff]
    %v422 = vld [vmem:[#allocation3 + $0x10] sm:$0xff]
    %v423 = vld [vmem:[#allocation3 + $0x18] sm:$0xff]
    %v424 = vld [vmem:[#allocation3 + $0x20] sm:$0xff]
    %v425 = vld [vmem:[#allocation3 + $0x28] sm:$0xff]
    %v426 = vld [vmem:[#allocation3 + $0x30] sm:$0xff]
    %v427 = vld [vmem:[#allocation3 + $0x38] sm:$0xff]
    %v428 = vlog2.pop %v420
    %v429 = vmul.f32 %v428, 0.6931472
    %v430 = vlog2.pop %v421
    %v431 = vmul.f32 %v430, 0.6931472
    %v432 = vlog2.pop %v422
    %v433 = vmul.f32 %v432, 0.6931472
    %v434 = vlog2.pop %v423
    %v435 = vmul.f32 %v434, 0.6931472
    %v436 = vlog2.pop %v424
    %v437 = vmul.f32 %v436, 0.6931472
    %v438 = vlog2.pop %v425
    %v439 = vmul.f32 %v438, 0.6931472
    %v440 = vlog2.pop %v426
    %v441 = vmul.f32 %v440, 0.6931472
    %v442 = vlog2.pop %v427
    %v443 = vmul.f32 %v442, 0.6931472
    %v444 = vadd.f32 %v412, %v429
    %v445 = vadd.f32 %v413, %v431
    %v446 = vadd.f32 %v414, %v433
    %v447 = vadd.f32 %v415, %v435
    %v448 = vadd.f32 %v416, %v437
    %v449 = vadd.f32 %v417, %v439
    %v450 = vadd.f32 %v418, %v441
    %v451 = vadd.f32 %v419, %v443
    %v452 = vld [vmem:[#allocation4] sm:$0xff]
    %v453 = vld [vmem:[#allocation4 + $0x8] sm:$0xff]
    %v454 = vld [vmem:[#allocation4 + $0x10] sm:$0xff]
    %v455 = vld [vmem:[#allocation4 + $0x18] sm:$0xff]
    %v456 = vld [vmem:[#allocation4 + $0x20] sm:$0xff]
    %v457 = vld [vmem:[#allocation4 + $0x28] sm:$0xff]
    %v458 = vld [vmem:[#allocation4 + $0x30] sm:$0xff]
    %v459 = vld [vmem:[#allocation4 + $0x38] sm:$0xff]
    %v460 = vsub.f32 %v444, %v452
    %v461 = vsub.f32 %v445, %v453
    %v462 = vsub.f32 %v446, %v454
    %v463 = vsub.f32 %v447, %v455
    %v464 = vsub.f32 %v448, %v456
    %v465 = vsub.f32 %v449, %v457
    %v466 = vsub.f32 %v450, %v458
    %v467 = vsub.f32 %v451, %v459
    %v468 = vmul.f32 %v444, 32.0
    %v469 = vmul.f32 %v445, 32.0
    %v470 = vmul.f32 %v446, 32.0
    %v471 = vmul.f32 %v447, 32.0
    %v472 = vmul.f32 %v448, 32.0
    %v473 = vmul.f32 %v449, 32.0
    %v474 = vmul.f32 %v450, 32.0
    %v475 = vmul.f32 %v451, 32.0
    %v476 = vld [vmem:[#allocation5] sm:$0xff]
    %v477 = vld [vmem:[#allocation5 + $0x8] sm:$0xff]
    %v478 = vld [vmem:[#allocation5 + $0x10] sm:$0xff]
    %v479 = vld [vmem:[#allocation5 + $0x18] sm:$0xff]
    %v480 = vld [vmem:[#allocation5 + $0x20] sm:$0xff]
    %v481 = vld [vmem:[#allocation5 + $0x28] sm:$0xff]
    %v482 = vld [vmem:[#allocation5 + $0x30] sm:$0xff]
    %v483 = vld [vmem:[#allocation5 + $0x38] sm:$0xff]
    %v484 = vsub.f32 %v468, %v476
    %v485 = vsub.f32 %v469, %v477
    %v486 = vsub.f32 %v470, %v478
    %v487 = vsub.f32 %v471, %v479
    %v488 = vsub.f32 %v472, %v480
    %v489 = vsub.f32 %v473, %v481
    %v490 = vsub.f32 %v474, %v482
    %v491 = vsub.f32 %v475, %v483
    %v492 = vmul.f32 %v460, 0.9
    %v493 = vmul.f32 %v461, 0.9
    %v494 = vmul.f32 %v462, 0.9
    %v495 = vmul.f32 %v463, 0.9
    %v496 = vmul.f32 %v464, 0.9
    %v497 = vmul.f32 %v465, 0.9
    %v498 = vmul.f32 %v466, 0.9
    %v499 = vmul.f32 %v467, 0.9
    %v500 = vmul.f32 %v484, 0.003125
    %v501 = vmul.f32 %v485, 0.003125
    %v502 = vmul.f32 %v486, 0.003125
    %v503 = vmul.f32 %v487, 0.003125
    %v504 = vmul.f32 %v488, 0.003125
    %v505 = vmul.f32 %v489, 0.003125
    %v506 = vmul.f32 %v490, 0.003125
    %v507 = vmul.f32 %v491, 0.003125
    %v508 = vadd.f32 %v492, %v500
    %v509 = vadd.f32 %v493, %v501
    %v510 = vadd.f32 %v494, %v502
    %v511 = vadd.f32 %v495, %v503
    %v512 = vadd.f32 %v496, %v504
    %v513 = vadd.f32 %v497, %v505
    %v514 = vadd.f32 %v498, %v506
    %v515 = vadd.f32 %v499, %v507
    %516 = vst.msk [vmem:[%s2] sm:$0xff] %vm160, %v508
    %517 = vst.msk [vmem:[%s2 + $0x8] sm:$0xff] %vm160, %v509
    %518 = vst.msk [vmem:[%s2 + $0x10] sm:$0xff] %vm160, %v510
    %519 = vst.msk [vmem:[%s2 + $0x18] sm:$0xff] %vm160, %v511
    %520 = vst.msk [vmem:[%s2 + $0x20] sm:$0xff] %vm160, %v512
    %521 = vst.msk [vmem:[%s2 + $0x28] sm:$0xff] %vm160, %v513
    %522 = vst.msk [vmem:[%s2 + $0x30] sm:$0xff] %vm160, %v514
    %523 = vst.msk [vmem:[%s2 + $0x38] sm:$0xff] %vm160, %v515
    %v524 = vld [vmem:[#allocation4] sm:$0xff]
    %v525 = vld [vmem:[#allocation4 + $0x8] sm:$0xff]
    %v526 = vld [vmem:[#allocation4 + $0x10] sm:$0xff]
    %v527 = vld [vmem:[#allocation4 + $0x18] sm:$0xff]
    %v528 = vld [vmem:[#allocation4 + $0x20] sm:$0xff]
    %v529 = vld [vmem:[#allocation4 + $0x28] sm:$0xff]
    %v530 = vld [vmem:[#allocation4 + $0x30] sm:$0xff]
    %v531 = vld [vmem:[#allocation4 + $0x38] sm:$0xff]
    %v532 = vld [vmem:[#allocation2] sm:$0xff]
    %v533 = vld [vmem:[#allocation2 + $0x8] sm:$0xff]
    %v534 = vld [vmem:[#allocation2 + $0x10] sm:$0xff]
    %v535 = vld [vmem:[#allocation2 + $0x18] sm:$0xff]
    %v536 = vld [vmem:[#allocation2 + $0x20] sm:$0xff]
    %v537 = vld [vmem:[#allocation2 + $0x28] sm:$0xff]
    %v538 = vld [vmem:[#allocation2 + $0x30] sm:$0xff]
    %v539 = vld [vmem:[#allocation2 + $0x38] sm:$0xff]
    %vm540 = vcmp.ge.f32.partialorder %v524, %v532
    %vm541 = vcmp.ge.f32.partialorder %v525, %v533
    %vm542 = vcmp.ge.f32.partialorder %v526, %v534
    %vm543 = vcmp.ge.f32.partialorder %v527, %v535
    %vm544 = vcmp.ge.f32.partialorder %v528, %v536
    %vm545 = vcmp.ge.f32.partialorder %v529, %v537
    %vm546 = vcmp.ge.f32.partialorder %v530, %v538
    %vm547 = vcmp.ge.f32.partialorder %v531, %v539
    %v548 = vsel %vm540, 1, 0
    %v549 = vsel %vm541, 1, 0
    %v550 = vsel %vm542, 1, 0
    %v551 = vsel %vm543, 1, 0
    %v552 = vsel %vm544, 1, 0
    %v553 = vsel %vm545, 1, 0
    %v554 = vsel %vm546, 1, 0
    %v555 = vsel %vm547, 1, 0
    %v556 = vcvt.s32.f32 %v548
    %v557 = vcvt.s32.f32 %v549
    %v558 = vcvt.s32.f32 %v550
    %v559 = vcvt.s32.f32 %v551
    %v560 = vcvt.s32.f32 %v552
    %v561 = vcvt.s32.f32 %v553
    %v562 = vcvt.s32.f32 %v554
    %v563 = vcvt.s32.f32 %v555
    %564 = vst.msk [vmem:[%s3] sm:$0xff] %vm160, %v556
    %565 = vst.msk [vmem:[%s3 + $0x8] sm:$0xff] %vm160, %v557
    %566 = vst.msk [vmem:[%s3 + $0x10] sm:$0xff] %vm160, %v558
    %567 = vst.msk [vmem:[%s3 + $0x18] sm:$0xff] %vm160, %v559
    %568 = vst.msk [vmem:[%s3 + $0x20] sm:$0xff] %vm160, %v560
    %569 = vst.msk [vmem:[%s3 + $0x28] sm:$0xff] %vm160, %v561
    %570 = vst.msk [vmem:[%s3 + $0x30] sm:$0xff] %vm160, %v562
    %571 = vst.msk [vmem:[%s3 + $0x38] sm:$0xff] %vm160, %v563
  $region17: #{tpu_custom_call.1} parent=0 // pred_fallthru
    _
  // Predicated region
  $region18: #{tpu_custom_call.1} parent=0 // pred_check
    _
  $region19: #{tpu_custom_call.1} parent=0 // pred_check_branch
    %573 = sbr.rel (0) target = $region21
  $region20: #{tpu_custom_call.1} parent=0 // pred_region
    _
  $region21: #{tpu_custom_call.1} parent=0 // pred_fallthru
    _
  // Predicated region
  $region22: #{tpu_custom_call.1} parent=0 // pred_check
    _
  $region23: #{tpu_custom_call.1} parent=0 // pred_check_branch
    %575 = sbr.rel (0) target = $region25
  $region24: #{tpu_custom_call.1} parent=0 // pred_region
    _
  $region25: #{tpu_custom_call.1} parent=0 // pred_fallthru
    _
  // Predicated region
  $region26: #{tpu_custom_call.1} parent=0 // pred_check
    _
  $region27: #{tpu_custom_call.1} parent=0 // pred_check_branch
    %577 = sbr.rel (0) target = $region29
  $region28: #{tpu_custom_call.1} parent=0 // pred_region
    _
  $region29: #{tpu_custom_call.1} parent=0 // pred_fallthru
    _
  // Predicated region
  $region30: #{tpu_custom_call.1} parent=0 // pred_check
    _
  $region31: #{tpu_custom_call.1} parent=0 // pred_check_branch
    %579 = sbr.rel (0) target = $region33
  $region32: #{tpu_custom_call.1} parent=0 // pred_region
    _
  $region33: #{tpu_custom_call.1} parent=0 // pred_fallthru
    _

</llo_original>
